<compile_context>
chip_gen: v7x
topology: tpu7x:2x2x1
jax: 0.10.0
libtpu: 0.0.40
codegen_flags: <defaults>
</compile_context>

<pallas_src>
import functools

import jax
import jax.numpy as jnp
from jax.experimental import pallas as pl
from jax.experimental.pallas import tpu as pltpu

EPS = 0.1
LANES = 128
SUBLANES = 8

_NEEDS_VARIANCE = ("z-score", "variance", "standard deviation")
_ALL_MODES = ("identity", "equi-z-score") + _NEEDS_VARIANCE


def _perturbation_loss_kernel(x_ref, y_ref, *rest, importance_weighting,
                              jmax, t_total, tile_rows, rem_last,
                              mask_last, has_skip):
    if importance_weighting in _NEEDS_VARIANCE:
        v_ref, num_ref, den_ref = rest
    else:
        num_ref, den_ref = rest
        v_ref = None

    c = pl.program_id(0)          # core-group (parallel axis)
    j = pl.program_id(1)          # reduction step within the core-group
    t = c * jmax + j              # global tile index

    @pl.when(j == 0)
    def _():
        num_ref[...] = jnp.zeros_like(num_ref)
        den_ref[...] = jnp.zeros_like(den_ref)

    # Stream native dtype from HBM; upcast to f32 for the math.
    x = x_ref[...].astype(jnp.float32)
    y = y_ref[...].astype(jnp.float32)

    if importance_weighting == "identity":
        w = None                                   # weight == 1 everywhere
    elif importance_weighting == "equi-z-score":
        w = jnp.abs(y) + EPS
    elif importance_weighting == "z-score":
        v = v_ref[...].astype(jnp.float32)
        # Exact divide kept; the kernel is HBM-bound so it is hidden anyway.
        w = (jnp.abs(y) + EPS) / (jnp.sqrt(v) + EPS)
    elif importance_weighting == "variance":
        v = v_ref[...].astype(jnp.float32)
        w = 1.0 / (v + EPS)
    elif importance_weighting == "standard deviation":
        v = v_ref[...].astype(jnp.float32)
        w = 1.0 / (jnp.sqrt(v) + EPS)
    else:
        raise ValueError(
            f"The input {importance_weighting} was not set correctly")

    diff = x - y
    num_c = diff * diff if w is None else w * (diff * diff)

    def _fold(a):
        # (tile_rows, 128) -> (8, 128) using pure VPU adds (no XLU reduce).
        return a.reshape(tile_rows // SUBLANES, SUBLANES, LANES).sum(axis=0)

    def _accumulate(num_tile, w_tile):
        num_ref[...] += _fold(num_tile)
        if w_tile is not None:
            den_ref[...] += _fold(w_tile)

    if mask_last:
        # Hot path: every tile except the last one accumulates unmasked.
        @pl.when(t < t_total - 1)
        def _():
            _accumulate(num_c, w)

        # Cold path: only the last tile pays for the iota/select masking.
        # (Masking the product via a select is NaN/Inf-safe for the garbage
        # read by the ragged last block.)
        @pl.when(t == t_total - 1)
        def _():
            rid = jax.lax.broadcasted_iota(jnp.int32, (tile_rows, LANES), 0)
            lid = jax.lax.broadcasted_iota(jnp.int32, (tile_rows, LANES), 1)
            valid = rid * LANES + lid < rem_last   # rem_last is a static int
            _accumulate(jnp.where(valid, num_c, 0.0),
                        None if w is None else jnp.where(valid, w, 0.0))
    elif has_skip:
        # Odd tile count split over 2 core-groups: one padded grid point.
        @pl.when(t < t_total)
        def _():
            _accumulate(num_c, w)
    else:
        _accumulate(num_c, w)


def perturbation_loss(inputs, labels, variance,
                      importance_weighting="z-score", tile_rows=None):
    if importance_weighting not in _ALL_MODES:
        raise ValueError(
            f"The input {importance_weighting} was not set correctly")

    assert inputs.shape == labels.shape
    needs_v = importance_weighting in _NEEDS_VARIANCE
    if needs_v:
        assert variance.shape == inputs.shape

    n = inputs.size
    rows = pl.cdiv(n, LANES)
    rows_padded = max(rows, SUBLANES)
    n_padded = rows_padded * LANES

    def _prep(a):
        # Keep native dtype (bf16 stays bf16 -> half the HBM bytes).  Only
        # pad (a single copy) when n is not already a multiple of 128; the
        # common aligned case is a free reshape.
        a = jnp.ravel(a)
        if n_padded != n:
            a = jnp.pad(a, (0, n_padded - n))
        return a.reshape(rows_padded, LANES)

    operands = [_prep(inputs), _prep(labels)]
    if needs_v:
        operands.append(_prep(variance))

    itemsize_sum = sum(jnp.dtype(a.dtype).itemsize for a in operands)

    if tile_rows is None:
        # Largest tile whose double-buffered input working set is ~12 MiB.
        tile_rows = (12 * 1024 * 1024) // (2 * LANES * itemsize_sum)
    tile_rows = min(int(tile_rows), 8192, (rows_padded // SUBLANES) * SUBLANES)
    tile_rows = max(SUBLANES, (tile_rows // SUBLANES) * SUBLANES)
    tile_elems = tile_rows * LANES

    t_total = pl.cdiv(rows_padded, tile_rows)      # total tiles
    n_cores = 2 if t_total >= 2 else 1             # 2-core split (v7x)
    jmax = pl.cdiv(t_total, n_cores)
    has_skip = (n_cores * jmax != t_total)
    rem_last = n - (t_total - 1) * tile_elems      # valid elems in last tile
    mask_last = (rem_last != tile_elems)

    if has_skip:
        def in_map(c, j):
            # Clamp the single padded grid point onto the last valid tile
            # (its contribution is skipped inside the kernel).
            return (jnp.minimum(c * jmax + j, t_total - 1), 0)
    else:
        def in_map(c, j):
            return (c * jmax + j, 0)

    def out_map(c, j):
        return (c, 0)

    # Double-buffered inputs + double-buffered (8,128) f32 partial outputs.
    vmem_need = 2 * tile_elems * itemsize_sum + 2 * 2 * SUBLANES * LANES * 4
    # Only ever raise the scoped limit (>= every generation's default).
    vmem_limit = int(min(max(vmem_need + (8 << 20), 32 << 20), 48 << 20))

    kernel = functools.partial(
        _perturbation_loss_kernel,
        importance_weighting=importance_weighting,
        jmax=jmax, t_total=t_total, tile_rows=tile_rows,
        rem_last=rem_last, mask_last=mask_last, has_skip=has_skip)

    num_parts, den_parts = pl.pallas_call(
        kernel,
        out_shape=(
            jax.ShapeDtypeStruct((n_cores * SUBLANES, LANES), jnp.float32),
            jax.ShapeDtypeStruct((n_cores * SUBLANES, LANES), jnp.float32),
        ),
        grid_spec=pltpu.PrefetchScalarGridSpec(
            num_scalar_prefetch=0,
            grid=(n_cores, jmax),
            in_specs=[pl.BlockSpec((tile_rows, LANES), in_map)
                      for _ in operands],
            out_specs=[pl.BlockSpec((SUBLANES, LANES), out_map),
                       pl.BlockSpec((SUBLANES, LANES), out_map)],
        ),
        compiler_params=pltpu.CompilerParams(
            dimension_semantics=("parallel", "arbitrary"),
            vmem_limit_bytes=vmem_limit),
    )(*operands)

    num = jnp.sum(num_parts)
    if importance_weighting == "identity":
        # Elementwise weights of 1: denominator is the exact element count.
        den = jnp.float32(n)
    else:
        den = jnp.sum(den_parts)
    return num / den


def _reference_loss(inputs, labels, variance, importance_weighting="z-score"):
    inputs = inputs.astype(jnp.float32)
    labels = labels.astype(jnp.float32)
    variance = variance.astype(jnp.float32)
    if importance_weighting == "identity":
        w = jnp.ones_like(labels)
    elif importance_weighting == "equi-z-score":
        w = jnp.abs(labels) + EPS
    elif importance_weighting == "z-score":
        w = (jnp.abs(labels) + EPS) / (jnp.sqrt(variance) + EPS)
    elif importance_weighting == "variance":
        w = 1.0 / (variance + EPS)
    elif importance_weighting == "standard deviation":
        w = 1.0 / (jnp.sqrt(variance) + EPS)
    return jnp.sum(w * (inputs - labels) ** 2) / jnp.sum(w)


if __name__ == "__main__":
    key = jax.random.PRNGKey(0)
    k1, k2, k3 = jax.random.split(key, 3)

    # Small NCHW-style tensors: batch=2, channels=4, spatial=16x16.
    shape = (2, 4, 16, 16)
    inputs = jax.random.normal(k1, shape, dtype=jnp.float32)
    labels = jax.random.normal(k2, shape, dtype=jnp.float32)
    variance = jax.random.uniform(k3, shape, dtype=jnp.float32,
                                  minval=0.05, maxval=2.0)

    # Main check: default 'z-score' weighting, single-tile path.
    loss = jax.block_until_ready(
        perturbation_loss(inputs, labels, variance, "z-score"))
    ref = _reference_loss(inputs, labels, variance, "z-score")
    assert jnp.allclose(loss, ref, rtol=1e-5, atol=1e-5), (loss, ref)

    # Odd-sized tensor: <128-lane tail, padded + masked last tile, no
    # variance operand is streamed for 'equi-z-score'.
    shape2 = (3, 5, 7)
    i2 = jax.random.normal(k1, shape2, dtype=jnp.float32)
    l2 = jax.random.normal(k2, shape2, dtype=jnp.float32)
    v2 = jax.random.uniform(k3, shape2, dtype=jnp.float32,
                            minval=0.05, maxval=2.0)
    loss2 = jax.block_until_ready(
        perturbation_loss(i2, l2, v2, "equi-z-score"))
    ref2 = _reference_loss(i2, l2, v2, "equi-z-score")
    assert jnp.allclose(loss2, ref2, rtol=1e-5, atol=1e-5), (loss2, ref2)

    # Force the multi-tile / 2-core-split / odd-tile-skip / masked-last-tile
    # path with a tiny tile override (n=2500 -> 20 rows, 3 tiles of 8 rows).
    shape3 = (4, 625)
    i3 = jax.random.normal(k1, shape3, dtype=jnp.float32)
    l3 = jax.random.normal(k2, shape3, dtype=jnp.float32)
    v3 = jax.random.uniform(k3, shape3, dtype=jnp.float32,
                            minval=0.05, maxval=2.0)
    loss3 = jax.block_until_ready(
        perturbation_loss(i3, l3, v3, "standard deviation", tile_rows=8))
    ref3 = _reference_loss(i3, l3, v3, "standard deviation")
    assert jnp.allclose(loss3, ref3, rtol=1e-5, atol=1e-5), (loss3, ref3)

    # Identity mode (denominator computed from the element count), even
    # 2-way split with no masking.
    loss4 = jax.block_until_ready(
        perturbation_loss(inputs, labels, variance, "identity", tile_rows=8))
    ref4 = _reference_loss(inputs, labels, variance, "identity")
    assert jnp.allclose(loss4, ref4, rtol=1e-5, atol=1e-5), (loss4, ref4)

    print("KERNEL_OK")
</pallas_src>

<mosaic_0001>
module attributes {stable_mosaic.version = 11 : i64} {
  func.func @_perturbation_loss_kernel(%arg0: i32, %arg1: i32, %arg2: memref<16x128xf32, #tpu.memory_space<vmem>>, %arg3: memref<16x128xf32, #tpu.memory_space<vmem>>, %arg4: memref<16x128xf32, #tpu.memory_space<vmem>>, %arg5: memref<8x128xf32, #tpu.memory_space<vmem>>, %arg6: memref<8x128xf32, #tpu.memory_space<vmem>>) attributes {dimension_semantics = [#tpu.dimension_semantics<parallel>, #tpu.dimension_semantics<arbitrary>], iteration_bounds = array<i64: 1, 1>, scalar_prefetch = 0 : i64, scratch_operands = 0 : i64, tpu.core_type = #tpu.core_type<tc>, window_params = [{transform_indices = @transform_0, window_bounds = array<i64: 16, 128>}, {transform_indices = @transform_1, window_bounds = array<i64: 16, 128>}, {transform_indices = @transform_2, window_bounds = array<i64: 16, 128>}, {transform_indices = @transform_3, window_bounds = array<i64: 8, 128>}, {transform_indices = @transform_4, window_bounds = array<i64: 8, 128>}]} {
    %c0_i32 = arith.constant 0 : i32
    %0 = arith.cmpi eq, %arg1, %c0_i32 : i32
    %1 = arith.extui %0 : i1 to i32
    %c0_i32_0 = arith.constant 0 : i32
    %2 = arith.cmpi ne, %1, %c0_i32_0 : i32
    scf.if %2 {
      %cst_17 = arith.constant 0.000000e+00 : f32
      %26 = vector.broadcast %cst_17 : f32 to vector<8x128xf32>
      %c0_18 = arith.constant 0 : index
      %c0_19 = arith.constant 0 : index
      %27 = vector.load %arg5[%c0_18, %c0_19] : memref<8x128xf32, #tpu.memory_space<vmem>>, vector<8x128xf32>
      tpu.vector_store %arg5[%c0_18, %c0_19], %26 {strides = array<i32>} : memref<8x128xf32, #tpu.memory_space<vmem>>, vector<8x128xf32>,
      %cst_20 = arith.constant 0.000000e+00 : f32
      %28 = vector.broadcast %cst_20 : f32 to vector<8x128xf32>
      %c0_21 = arith.constant 0 : index
      %c0_22 = arith.constant 0 : index
      %29 = vector.load %arg6[%c0_21, %c0_22] : memref<8x128xf32, #tpu.memory_space<vmem>>, vector<8x128xf32>
      tpu.vector_store %arg6[%c0_21, %c0_22], %28 {strides = array<i32>} : memref<8x128xf32, #tpu.memory_space<vmem>>, vector<8x128xf32>,
    } else {
    }
    %c0 = arith.constant 0 : index
    %c0_1 = arith.constant 0 : index
    %3 = vector.load %arg2[%c0, %c0_1] : memref<16x128xf32, #tpu.memory_space<vmem>>, vector<16x128xf32>
    %c0_2 = arith.constant 0 : index
    %c0_3 = arith.constant 0 : index
    %4 = vector.load %arg3[%c0_2, %c0_3] : memref<16x128xf32, #tpu.memory_space<vmem>>, vector<16x128xf32>
    %c0_4 = arith.constant 0 : index
    %c0_5 = arith.constant 0 : index
    %5 = vector.load %arg4[%c0_4, %c0_5] : memref<16x128xf32, #tpu.memory_space<vmem>>, vector<16x128xf32>
    %6 = math.absf %4 : vector<16x128xf32>
    %cst = arith.constant 1.000000e-01 : f32
    %7 = vector.broadcast %cst : f32 to vector<16x128xf32>
    %8 = arith.addf %6, %7 : vector<16x128xf32>
    %9 = math.sqrt %5 : vector<16x128xf32>
    %cst_6 = arith.constant 1.000000e-01 : f32
    %10 = vector.broadcast %cst_6 : f32 to vector<16x128xf32>
    %11 = arith.addf %9, %10 : vector<16x128xf32>
    %12 = arith.divf %8, %11 : vector<16x128xf32>
    %13 = arith.subf %3, %4 : vector<16x128xf32>
    %14 = arith.mulf %13, %13 : vector<16x128xf32>
    %15 = arith.mulf %12, %14 : vector<16x128xf32>
    %c0_7 = arith.constant 0 : index
    %c0_8 = arith.constant 0 : index
    %16 = vector.load %arg5[%c0_7, %c0_8] : memref<8x128xf32, #tpu.memory_space<vmem>>, vector<8x128xf32>
    %17 = vector.shape_cast %15 : vector<16x128xf32> to vector<2x8x128xf32>
    %cst_9 = arith.constant dense<0.000000e+00> : vector<8x128xf32>
    %18 = vector.multi_reduction <add>, %17, %cst_9 [0] : vector<2x8x128xf32> to vector<8x128xf32>
    %19 = arith.addf %16, %18 : vector<8x128xf32>
    %c0_10 = arith.constant 0 : index
    %c0_11 = arith.constant 0 : index
    %20 = vector.load %arg5[%c0_10, %c0_11] : memref<8x128xf32, #tpu.memory_space<vmem>>, vector<8x128xf32>
    tpu.vector_store %arg5[%c0_10, %c0_11], %19 {strides = array<i32>} : memref<8x128xf32, #tpu.memory_space<vmem>>, vector<8x128xf32>,
    %c0_12 = arith.constant 0 : index
    %c0_13 = arith.constant 0 : index
    %21 = vector.load %arg6[%c0_12, %c0_13] : memref<8x128xf32, #tpu.memory_space<vmem>>, vector<8x128xf32>
    %22 = vector.shape_cast %12 : vector<16x128xf32> to vector<2x8x128xf32>
    %cst_14 = arith.constant dense<0.000000e+00> : vector<8x128xf32>
    %23 = vector.multi_reduction <add>, %22, %cst_14 [0] : vector<2x8x128xf32> to vector<8x128xf32>
    %24 = arith.addf %21, %23 : vector<8x128xf32>
    %c0_15 = arith.constant 0 : index
    %c0_16 = arith.constant 0 : index
    %25 = vector.load %arg6[%c0_15, %c0_16] : memref<8x128xf32, #tpu.memory_space<vmem>>, vector<8x128xf32>
    tpu.vector_store %arg6[%c0_15, %c0_16], %24 {strides = array<i32>} : memref<8x128xf32, #tpu.memory_space<vmem>>, vector<8x128xf32>,
    return
  }
  func.func @transform_0(%arg0: i32, %arg1: i32) -> (i32, i32) {
    %c1_i32 = arith.constant 1 : i32
    %0 = arith.muli %arg0, %c1_i32 : i32
    %1 = arith.addi %0, %arg1 : i32
    %c0_i32 = arith.constant 0 : i32
    %c0_i32_0 = arith.constant 0 : i32
    return %1, %c0_i32 : i32, i32
  }
  func.func @transform_1(%arg0: i32, %arg1: i32) -> (i32, i32) {
    %c1_i32 = arith.constant 1 : i32
    %0 = arith.muli %arg0, %c1_i32 : i32
    %1 = arith.addi %0, %arg1 : i32
    %c0_i32 = arith.constant 0 : i32
    %c0_i32_0 = arith.constant 0 : i32
    return %1, %c0_i32 : i32, i32
  }
  func.func @transform_2(%arg0: i32, %arg1: i32) -> (i32, i32) {
    %c1_i32 = arith.constant 1 : i32
    %0 = arith.muli %arg0, %c1_i32 : i32
    %1 = arith.addi %0, %arg1 : i32
    %c0_i32 = arith.constant 0 : i32
    %c0_i32_0 = arith.constant 0 : i32
    return %1, %c0_i32 : i32, i32
  }
  func.func @transform_3(%arg0: i32, %arg1: i32) -> (i32, i32) {
    %c0_i32 = arith.constant 0 : i32
    %c0_i32_0 = arith.constant 0 : i32
    return %arg0, %c0_i32 : i32, i32
  }
  func.func @transform_4(%arg0: i32, %arg1: i32) -> (i32, i32) {
    %c0_i32 = arith.constant 0 : i32
    %c0_i32_0 = arith.constant 0 : i32
    return %arg0, %c0_i32 : i32, i32
  }
}

</mosaic_0001>

<llo_original>
// kernel: tpu_custom_call.1
$region0: #{tpu_custom_call.1}
  #allocation0 [shape = 'u32[]', space=smem, size = 0x4, offset = 0x4, fixed_abs, tag = 'smem constant byte address 0x4 - core index']
  #allocation1 [shape = 'u32[144,128]{1,0:T(1,128)}', space=vmem, size = 0x12000, scoped, tag = 'internal scratch']
  %s0 = inlined_call_operand.hbm [shape: f32[16,128], index: 0, kind: input, shape index: {}]
  %s1 = inlined_call_operand.hbm [shape: f32[16,128], index: 1, kind: input, shape index: {}]
  %s2 = inlined_call_operand.hbm [shape: f32[16,128], index: 2, kind: input, shape index: {}]
  %s3 = inlined_call_operand.hbm [shape: f32[8,128], index: 3, kind: output, shape index: {0}]
  %s4 = inlined_call_operand.hbm [shape: f32[8,128], index: 4, kind: output, shape index: {1}]
  %5 = xla_tuple %s3, %s4
  %s6 = sld [smem:[#allocation0]]
  $region46: #{tpu_custom_call.1} parent=0
    _
  %s8 = ssub.s32 1, %s6
  %s9 = scalar_select 0, %s8, %s6
  $region1: #{tpu_custom_call.1} parent=0
    #allocation2 [shape = 'u8[8192]{0}', space=vmem, size = 0x2000, scoped, tag = 'input window, operand 0, single buffered']
    #allocation3 [shape = 's32[1]{0}', space=sflag, size = 0x4, scoped, tag = 'scoped memory for tpu_custom_call.1']
    #allocation4 [shape = 's32[1]{0}', space=sflag, size = 0x4, scoped, tag = 'scoped memory for tpu_custom_call.1']
    #allocation5 [shape = 'u8[8192]{0}', space=vmem, size = 0x2000, scoped, tag = 'input window, operand 1, single buffered']
    #allocation6 [shape = 's32[1]{0}', space=sflag, size = 0x4, scoped, tag = 'scoped memory for tpu_custom_call.1']
    #allocation7 [shape = 'u8[8192]{0}', space=vmem, size = 0x2000, scoped, tag = 'input window, operand 2, single buffered']
    #allocation8 [shape = 'u8[4096]{0}', space=vmem, size = 0x1000, scoped, tag = 'output window, operand 0, single buffered']
    #allocation9 [shape = 'u8[4096]{0}', space=vmem, size = 0x1000, scoped, tag = 'output window, operand 1, single buffered']
    #allocation10 [shape = 's32[1]{0}', space=sflag, size = 0x4, scoped, tag = 'scoped memory for tpu_custom_call.1']
    %10 = vsyncpa [#allocation3], 0
    %11 = vsyncpa [#allocation6], 0
    %12 = vsyncpa [#allocation4], 0
    %13 = vsyncpa [#allocation10], 0
    // Predicated region
    $region2: #{tpu_custom_call.1} parent=1 // pred_check
      _
    $region3: #{tpu_custom_call.1} parent=1 // pred_check_branch
      %15 = sbr.rel (0) target = $region5
    $region4: #{tpu_custom_call.1} parent=1 // pred_region
      %s16 = sadd.s32 0, 0
      %s17 = smul.u32 2, %s16
      %s19 = ssub.s32 256, 256
      %20 = vsyncadd [#allocation3], %s19
      %s21 = smul.addr %s17, 128
      %s22 = scalar_lea.hbm %s0, %s21
      %s23 = sshll.u32 [#allocation2], 4
      %s24 = int_to_ptr.vmem [resolvable:$true] %s23
      %29 = dma.hbm_to_vmem [thread:$0]  %s22, 256, %s24, [#allocation3], 128, 128, 8
    $region5: #{tpu_custom_call.1} parent=1 // pred_fallthru
      _
    // Predicated region
    $region6: #{tpu_custom_call.1} parent=1 // pred_check
      _
    $region7: #{tpu_custom_call.1} parent=1 // pred_check_branch
      %31 = sbr.rel (0) target = $region9
    $region8: #{tpu_custom_call.1} parent=1 // pred_region
      %s32 = sadd.s32 0, 0
      %s33 = smul.u32 2, %s32
      %s35 = ssub.s32 256, 256
      %36 = vsyncadd [#allocation6], %s35
      %s37 = smul.addr %s33, 128
      %s38 = scalar_lea.hbm %s1, %s37
      %s39 = sshll.u32 [#allocation5], 4
      %s40 = int_to_ptr.vmem [resolvable:$true] %s39
      %45 = dma.hbm_to_vmem [thread:$0]  %s38, 256, %s40, [#allocation6], 128, 128, 8
    $region9: #{tpu_custom_call.1} parent=1 // pred_fallthru
      _
    // Predicated region
    $region10: #{tpu_custom_call.1} parent=1 // pred_check
      _
    $region11: #{tpu_custom_call.1} parent=1 // pred_check_branch
      %47 = sbr.rel (0) target = $region13
    $region12: #{tpu_custom_call.1} parent=1 // pred_region
      %s48 = sadd.s32 0, 0
      %s49 = smul.u32 2, %s48
      %s51 = ssub.s32 256, 256
      %52 = vsyncadd [#allocation6], %s51
      %s53 = smul.addr %s49, 128
      %s54 = scalar_lea.hbm %s2, %s53
      %s55 = sshll.u32 [#allocation7], 4
      %s56 = int_to_ptr.vmem [resolvable:$true] %s55
      %61 = dma.hbm_to_vmem [thread:$0]  %s54, 256, %s56, [#allocation6], 128, 128, 8
    $region13: #{tpu_custom_call.1} parent=1 // pred_fallthru
      _
    // Predicated region
    $region14: #{tpu_custom_call.1} parent=1 // pred_check
      _
    $region15: #{tpu_custom_call.1} parent=1 // pred_check_branch
      %63 = sbr.rel (0) target = $region17
    $region16: #{tpu_custom_call.1} parent=1 // pred_region
      %64 = dma.done [#allocation3], 256
    $region17: #{tpu_custom_call.1} parent=1 // pred_fallthru
      _
    // Predicated region
    $region18: #{tpu_custom_call.1} parent=1 // pred_check
      _
    $region19: #{tpu_custom_call.1} parent=1 // pred_check_branch
      %66 = sbr.rel (0) target = $region21
    $region20: #{tpu_custom_call.1} parent=1 // pred_region
      %67 = dma.done [#allocation6], 256
    $region21: #{tpu_custom_call.1} parent=1 // pred_fallthru
      _
    // Predicated region
    $region22: #{tpu_custom_call.1} parent=1 // pred_check
      _
    $region23: #{tpu_custom_call.1} parent=1 // pred_check_branch
      %69 = sbr.rel (0) target = $region25
    $region24: #{tpu_custom_call.1} parent=1 // pred_region
      %70 = dma.done [#allocation6], 256
    $region25: #{tpu_custom_call.1} parent=1 // pred_fallthru
      _
    %s71 = sadd.s32 0, 0
    %s72 = smul.u32 2, %s71
    %s73 = sadd.s32 0, 0
    %s74 = smul.u32 2, %s73
    %s75 = sadd.s32 0, 0
    %s76 = smul.u32 2, %s75
    %p77 = scmp.eq.s32.totalorder 0, 0
    // Predicated region
    $region26: #{tpu_custom_call.1} parent=1 // pred_check
      %p78 = pneg %p77
    $region27: #{tpu_custom_call.1} parent=1 // pred_check_branch
      %80 = sbr.rel (%p78) target = $region29
    $region28: #{tpu_custom_call.1} parent=1 // pred_region
      %81 = vst [vmem:[#allocation8] sm:$0xff] 0.0
      %82 = vst [vmem:[#allocation9] sm:$0xff] 0.0
    $region29: #{tpu_custom_call.1} parent=1 // pred_fallthru
      _
    %v83 = vld [vmem:[#allocation2] sm:$0xff]
    %v84 = vld [vmem:[#allocation2 + $0x8] sm:$0xff]
    %v85 = vld [vmem:[#allocation5] sm:$0xff]
    %v86 = vld [vmem:[#allocation5 + $0x8] sm:$0xff]
    %v87 = vld [vmem:[#allocation7] sm:$0xff]
    %v88 = vld [vmem:[#allocation7 + $0x8] sm:$0xff]
    %v89 = vand.u32 2147483647, %v85
    %v90 = vand.u32 2147483647, %v86
    %v91 = vadd.f32 %v89, 0.1
    %v92 = vadd.f32 %v90, 0.1
    %v93 = vrsqrt.pop %v87
    %v94 = vmul.f32 %v87, %v93
    %vm95 = vcmp.eq.f32.partialorder %v87, inf
    %v96 = vsel %vm95, %v87, %v94
    %vm97 = vcmp.eq.f32.partialorder %v87, 0.0
    %v98 = vand.u32 %v87, 2147483648
    %v99 = vsel %vm97, %v98, %v96
    %v100 = vrsqrt.pop %v88
    %v101 = vmul.f32 %v88, %v100
    %vm102 = vcmp.eq.f32.partialorder %v88, inf
    %v103 = vsel %vm102, %v88, %v101
    %vm104 = vcmp.eq.f32.partialorder %v88, 0.0
    %v105 = vand.u32 %v88, 2147483648
    %v106 = vsel %vm104, %v105, %v103
    %v107 = vadd.f32 %v99, 0.1
    %v108 = vadd.f32 %v106, 0.1
    %v109 = vrcp.pop %v107
    %v110 = vmul.f32 %v91, %v109
    %v111 = vrcp.pop %v108
    %v112 = vmul.f32 %v92, %v111
    %v113 = vsub.f32 %v83, %v85
    %v114 = vsub.f32 %v84, %v86
    %v115 = vmul.f32 %v113, %v113
    %v116 = vmul.f32 %v114, %v114
    %v117 = vmul.f32 %v110, %v115
    %v118 = vmul.f32 %v112, %v116
    %v119 = vld [vmem:[#allocation8] sm:$0xff]
    %v120 = vadd.f32 %v117, %v118
    %v121 = vadd.f32 %v119, %v120
    %122 = vst [vmem:[#allocation8] sm:$0xff] %v121
    %v123 = vld [vmem:[#allocation9] sm:$0xff]
    %v124 = vadd.f32 %v110, %v112
    %v125 = vadd.f32 %v123, %v124
    %126 = vst [vmem:[#allocation9] sm:$0xff] %v125
    // Predicated region
    $region30: #{tpu_custom_call.1} parent=1 // pred_check
      _
    $region31: #{tpu_custom_call.1} parent=1 // pred_check_branch
      %128 = sbr.rel (0) target = $region33
    $region32: #{tpu_custom_call.1} parent=1 // pred_region
      %s130 = ssub.s32 128, 128
      %131 = vsyncadd [#allocation4], %s130
      %s133 = sshll.u32 [#allocation8], 4
      %s134 = int_to_ptr.vmem [resolvable:$true] %s133
      %136 = dma.vmem_to_hbm [thread:$0]  %s134, 128, %s3, [#allocation4]
    $region33: #{tpu_custom_call.1} parent=1 // pred_fallthru
      _
    // Predicated region
    $region34: #{tpu_custom_call.1} parent=1 // pred_check
      _
    $region35: #{tpu_custom_call.1} parent=1 // pred_check_branch
      %138 = sbr.rel (0) target = $region37
    $region36: #{tpu_custom_call.1} parent=1 // pred_region
      %s140 = ssub.s32 128, 128
      %141 = vsyncadd [#allocation10], %s140
      %s143 = sshll.u32 [#allocation9], 4
      %s144 = int_to_ptr.vmem [resolvable:$true] %s143
      %146 = dma.vmem_to_hbm [thread:$0]  %s144, 128, %s4, [#allocation10]
    $region37: #{tpu_custom_call.1} parent=1 // pred_fallthru
      _
    // Predicated region
    $region38: #{tpu_custom_call.1} parent=1 // pred_check
      _
    $region39: #{tpu_custom_call.1} parent=1 // pred_check_branch
      %148 = sbr.rel (0) target = $region41
    $region40: #{tpu_custom_call.1} parent=1 // pred_region
      %149 = dma.done [#allocation4], 128
    $region41: #{tpu_custom_call.1} parent=1 // pred_fallthru
      _
    // Predicated region
    $region42: #{tpu_custom_call.1} parent=1 // pred_check
      _
    $region43: #{tpu_custom_call.1} parent=1 // pred_check_branch
      %151 = sbr.rel (0) target = $region45
    $region44: #{tpu_custom_call.1} parent=1 // pred_region
      %152 = dma.done [#allocation10], 128
    $region45: #{tpu_custom_call.1} parent=1 // pred_fallthru
      _
    %153 = vsyncpa [#allocation3], 1
    %154 = vsyncpa [#allocation6], 1
    %155 = vsyncpa [#allocation4], 1
    %156 = vsyncpa [#allocation10], 1

</llo_original>
